<compile_context>
chip_gen: v6e
topology: v6e:2x2x1
jax: 0.10.0
libtpu: 0.0.40
codegen_flags: <defaults>
</compile_context>

<pallas_src>
import jax
import jax.numpy as jnp
import numpy as np
from jax.experimental import pallas as pl
from jax.experimental.pallas import tpu as pltpu

# Small, module-consistent sizes
B, S, H, V, R = 2, 8, 32, 64, 16
LORA_SCALE = 32.0 / 16.0  # lora_alpha / r


def _reward_kernel(mask_ref,   # SMEM (B,)        int32  packed attention-mask bits
                   x_ref,      # VMEM (B*S+B, H)  f32    [token rows ; final-token rows]
                   wqkv_ref,   # VMEM (H, 3H)     bf16   [Wq|Wk|Wv] with LoRA folded
                   wov_ref,    # VMEM (1, H)      f32    Wo_eff @ value_w (o_proj folded into head)
                   vw_ref,     # VMEM (1, H)      f32    value-head weight (residual path)
                   vb_ref,     # VMEM (1, 1)      f32    value-head bias
                   out_ref):   # VMEM (B, 1)      f32    rewards
    x = x_ref[...]                                              # (B*S+B, H) f32

    # Single fused Q|K|V projection — the only MXU op in the kernel.
    qkv = jnp.dot(x.astype(jnp.bfloat16), wqkv_ref[...],
                  preferred_element_type=jnp.float32)           # (B*S+B, 3H) f32

    xf = x[B * S:, :]                                           # (B, H) final-token rows (residual, f32)
    qf = qkv[B * S:, 0:H]                                       # (B, H) final-token queries
    scale = 1.0 / jnp.sqrt(jnp.float32(H))

    wov = wov_ref[...]                                          # (1, H)
    vw = vw_ref[...]                                            # (1, H)
    iota_s = jax.lax.broadcasted_iota(jnp.int32, (S, 1), 0)     # (S, 1)

    for b in range(B):   # static unroll (B=2): per-row attention entirely on VPU/XLU
        k_b = qkv[b * S:(b + 1) * S, H:2 * H]                   # (S, H) f32
        v_b = qkv[b * S:(b + 1) * S, 2 * H:3 * H]               # (S, H) f32
        q_b = qf[b:b + 1, :]                                    # (1, H) f32

        # scores[s] = <q, k_s>/sqrt(H): VPU broadcast-mul + lane reduction (no MXU).
        scores = jnp.sum(q_b * k_b, axis=-1, keepdims=True) * scale    # (S, 1) f32

        # Exact key mask rebuilt from the packed SMEM word (arbitrary masks OK).
        word = jnp.full((S, 1), mask_ref[b], dtype=jnp.int32)
        bits = jax.lax.shift_right_logical(word, iota_s) & 1           # (S, 1) int32
        scores = jnp.where(bits > 0, scores, jnp.float32(-1e30))

        m = jnp.max(scores, axis=0, keepdims=True)                     # (1, 1)
        p = jnp.exp(scores - m)                                        # (S, 1)
        denom = jnp.sum(p, axis=0, keepdims=True)                      # (1, 1)

        # ctx = softmax(scores) @ V ; o_proj + value head folded to one lane reduce:
        #   (ctx @ Wo_eff) . vw == ctx . (Wo_eff @ vw) == ctx . wov    (exact at eval)
        ctx = jnp.sum(p * v_b, axis=0, keepdims=True)                  # (1, H)
        attn = jnp.sum(ctx * wov, axis=-1, keepdims=True)              # (1, 1)
        attn = attn * pl.reciprocal(denom, approx=True)                # EUP slot
        resid = jnp.sum(xf[b:b + 1, :] * vw, axis=-1, keepdims=True)   # (1, 1)

        out_ref[b:b + 1, :] = attn + resid + vb_ref[...]               # (1, 1) store


def init_params(key):
    ks = jax.random.split(key, 16)
    n = lambda k, shape, s=0.02: jax.random.normal(k, shape, jnp.float32) * s
    return dict(
        emb=n(ks[0], (V, H)),
        wq=n(ks[1], (H, H)), wk=n(ks[2], (H, H)),
        wv=n(ks[3], (H, H)), wo=n(ks[4], (H, H)),
        # LoRA adapters (A: (r, in), B: (out, r)); nonzero B to exercise the path
        aq=n(ks[5], (R, H)), bq=n(ks[6], (H, R)),
        ak=n(ks[7], (R, H)), bk=n(ks[8], (H, R)),
        av=n(ks[9], (R, H)), bv=n(ks[10], (H, R)),
        ao=n(ks[11], (R, H)), bo=n(ks[12], (H, R)),
        vw=n(ks[13], (H, 1), 0.1),
        vb=n(ks[14], (1, 1), 0.1),
    )


def _fold_lora(w, a, b):
    # Exact at eval time (LoRA dropout == identity):
    #   x @ W + s*(x @ A^T) @ B^T  ==  x @ (W + s*(B @ A)^T)
    return w + LORA_SCALE * (b @ a).T


def reward_model_forward(input_ids, attention_mask, params):
    # ---- plain-JAX glue: embedding lookup, eval-time folds, gather, bit packing ----
    x = params['emb'][input_ids].astype(jnp.float32)                  # (B, S, H)
    mask_i = attention_mask.astype(jnp.int32)

    # final_token_index = attention_mask.sum(dim=1) - 1 (clamped for all-zero rows)
    final_idx = jnp.maximum(jnp.sum(mask_i, axis=1) - 1, 0)           # (B,)
    gidx = jnp.repeat(final_idx[:, None, None], H, axis=2)            # (B, 1, H)
    xf = jnp.take_along_axis(x, gidx, axis=1)[:, 0, :]                # (B, H)

    # projection input = all token rows + gathered final-token rows, so the
    # final-token queries come out of the same fused matmul (one MXU pass).
    x_proj = jnp.concatenate([x.reshape(B * S, H), xf], axis=0)       # (B*S+B, H)

    # attention-mask bits packed into one int32 per batch row (exact, via SMEM)
    mask_packed = jnp.sum(mask_i * (1 << jnp.arange(S, dtype=jnp.int32)),
                          axis=1).astype(jnp.int32)                   # (B,)

    # eval-time LoRA fold + fused [Wq|Wk|Wv]
    wq = _fold_lora(params['wq'], params['aq'], params['bq'])
    wk = _fold_lora(params['wk'], params['ak'], params['bk'])
    wv = _fold_lora(params['wv'], params['av'], params['bv'])
    wo = _fold_lora(params['wo'], params['ao'], params['bo'])
    wqkv = jnp.concatenate([wq, wk, wv], axis=1).astype(jnp.bfloat16)  # (H, 3H)

    # o_proj folded into the value head: (ctx @ Wo_eff) @ vw == ctx @ (Wo_eff @ vw)
    wov = (wo @ params['vw']).reshape(1, H).astype(jnp.float32)        # (1, H)
    vw = params['vw'].reshape(1, H).astype(jnp.float32)                # (1, H)
    vb = params['vb'].reshape(1, 1).astype(jnp.float32)                # (1, 1)

    # TODO(synk): at real model dims this becomes a gridded kernel with (K,N)-tiled
    # weight BlockSpecs budgeted against VMEM incl. double-buffering (64 MiB on v7x
    # => ~half-size tiles vs v6e), lane-dense N-tiles in multiples of 128/256, and
    # explicit vmem_limit_bytes; at toy sizes one un-gridded invocation is fastest.
    out = pl.pallas_call(
        _reward_kernel,
        out_shape=jax.ShapeDtypeStruct((B, 1), jnp.float32),
        in_specs=[
            pl.BlockSpec(memory_space=pltpu.MemorySpace.SMEM),   # packed mask bits
            pl.BlockSpec(memory_space=pltpu.MemorySpace.VMEM),   # x_proj
            pl.BlockSpec(memory_space=pltpu.MemorySpace.VMEM),   # wqkv (LoRA folded)
            pl.BlockSpec(memory_space=pltpu.MemorySpace.VMEM),   # wov  (Wo @ value_w)
            pl.BlockSpec(memory_space=pltpu.MemorySpace.VMEM),   # value-head weight
            pl.BlockSpec(memory_space=pltpu.MemorySpace.VMEM),   # value-head bias
        ],
        out_specs=pl.BlockSpec(memory_space=pltpu.MemorySpace.VMEM),
    )(mask_packed, x_proj, wqkv, wov, vw, vb)
    return out[:, 0]                                                   # (B,) like .squeeze(-1)


def reward_model_reference(input_ids, attention_mask, p):
    # pure-JAX f32 reference (unfused LoRA, full-sequence attention, explicit gather)
    x = p['emb'][input_ids].astype(jnp.float32)
    m = attention_mask.astype(jnp.int32)

    def lora(inp, w, a, b):
        return inp @ w + LORA_SCALE * ((inp @ a.T) @ b.T)

    q = lora(x, p['wq'], p['aq'], p['bq'])
    k = lora(x, p['wk'], p['ak'], p['bk'])
    v = lora(x, p['wv'], p['av'], p['bv'])
    s = jnp.einsum('bqh,bkh->bqk', q, k) / jnp.sqrt(jnp.float32(H))
    s = jnp.where((m > 0)[:, None, :], s, -1e30)
    pr = jax.nn.softmax(s, axis=-1)
    ctx = jnp.einsum('bqk,bkh->bqh', pr, v)
    hidden = lora(ctx, p['wo'], p['ao'], p['bo']) + x
    idx = jnp.sum(m, axis=1) - 1
    gidx = jnp.repeat(idx[:, None, None], H, axis=2)
    final_hidden = jnp.take_along_axis(hidden, gidx, axis=1)[:, 0]
    return (final_hidden @ p['vw'] + p['vb'][0])[:, 0]


if __name__ == "__main__":
    key = jax.random.PRNGKey(0)
    k_param, k_ids = jax.random.split(key)
    params = init_params(k_param)

    input_ids = jax.random.randint(k_ids, (B, S), 0, V, dtype=jnp.int32)
    # NOTE: an all-zero mask row gives final_idx == -1 (undefined in the original
    # module too); test data always has at least one valid token per row.
    attention_mask = jnp.array([[1, 1, 1, 1, 1, 1, 1, 1],
                                [1, 1, 1, 1, 1, 0, 0, 0]], dtype=jnp.int32)

    out = reward_model_forward(input_ids, attention_mask, params)
    out = jax.block_until_ready(out)

    ref = reward_model_reference(input_ids, attention_mask, params)
    np.testing.assert_allclose(np.asarray(out), np.asarray(ref),
                               rtol=2e-2, atol=5e-3)
    print("KERNEL_OK")
</pallas_src>

<mosaic_0001>
module attributes {stable_mosaic.version = 11 : i64} {
  func.func @_reward_kernel(%arg0: memref<2xi32, #tpu.memory_space<smem>>, %arg1: memref<18x32xf32, #tpu.memory_space<vmem>>, %arg2: memref<32x96xbf16, #tpu.memory_space<vmem>>, %arg3: memref<1x32xf32, #tpu.memory_space<vmem>>, %arg4: memref<1x32xf32, #tpu.memory_space<vmem>>, %arg5: memref<1x1xf32, #tpu.memory_space<vmem>>, %arg6: memref<2x1xf32, #tpu.memory_space<vmem>>) attributes {dimension_semantics = [], scalar_prefetch = 0 : i64, scratch_operands = 0 : i64, tpu.core_type = #tpu.core_type<tc>} {
    %c0 = arith.constant 0 : index
    %c0_0 = arith.constant 0 : index
    %0 = vector.load %arg1[%c0, %c0_0] : memref<18x32xf32, #tpu.memory_space<vmem>>, vector<18x32xf32>
    %1 = arith.truncf %0 : vector<18x32xf32> to vector<18x32xbf16>
    %c0_1 = arith.constant 0 : index
    %c0_2 = arith.constant 0 : index
    %2 = vector.load %arg2[%c0_1, %c0_2] : memref<32x96xbf16, #tpu.memory_space<vmem>>, vector<32x96xbf16>
    %cst = arith.constant dense<0.000000e+00> : vector<18x96xf32>
    %3 = tpu.matmul %1, %2, %cst {dimension_numbers = #tpu.dot_dimension_numbers<[1], [0], [0], [1], [0, 0, 1, 1], [], []>} : vector<18x32xbf16>, vector<32x96xbf16>, vector<18x96xf32> -> vector<18x96xf32>
    %4 = vector.extract_strided_slice %0 {offsets = [16, 0], sizes = [2, 32], strides = [1, 1]} : vector<18x32xf32> to vector<2x32xf32>
    %5 = vector.extract_strided_slice %3 {offsets = [16, 0], sizes = [2, 32], strides = [1, 1]} : vector<18x96xf32> to vector<2x32xf32>
    %cst_3 = arith.constant 3.200000e+01 : f32
    %6 = math.sqrt %cst_3 : f32
    %cst_4 = arith.constant 1.000000e+00 : f32
    %7 = arith.divf %cst_4, %6 : f32
    %c0_5 = arith.constant 0 : index
    %c0_6 = arith.constant 0 : index
    %8 = vector.load %arg3[%c0_5, %c0_6] : memref<1x32xf32, #tpu.memory_space<vmem>>, vector<1x32xf32>
    %c0_7 = arith.constant 0 : index
    %c0_8 = arith.constant 0 : index
    %9 = vector.load %arg4[%c0_7, %c0_8] : memref<1x32xf32, #tpu.memory_space<vmem>>, vector<1x32xf32>
    %10 = tpu.iota {dimensions = array<i32: 0>} : vector<8x1xi32>
    %11 = vector.extract_strided_slice %3 {offsets = [0, 32], sizes = [8, 32], strides = [1, 1]} : vector<18x96xf32> to vector<8x32xf32>
    %12 = vector.extract_strided_slice %3 {offsets = [0, 64], sizes = [8, 32], strides = [1, 1]} : vector<18x96xf32> to vector<8x32xf32>
    %13 = vector.extract_strided_slice %5 {offsets = [0, 0], sizes = [1, 32], strides = [1, 1]} : vector<2x32xf32> to vector<1x32xf32>
    %14 = vector.broadcast %13 : vector<1x32xf32> to vector<8x32xf32>
    %15 = arith.mulf %14, %11 : vector<8x32xf32>
    %cst_9 = arith.constant dense<0.000000e+00> : vector<8xf32>
    %16 = vector.multi_reduction <add>, %15, %cst_9 [1] : vector<8x32xf32> to vector<8xf32>
    %17 = vector.shape_cast %16 : vector<8xf32> to vector<8x1xf32>
    %18 = vector.broadcast %7 : f32 to vector<8x1xf32>
    %19 = arith.mulf %17, %18 : vector<8x1xf32>
    %c0_10 = arith.constant 0 : index
    %20 = memref.load %arg0[%c0_10] : memref<2xi32, #tpu.memory_space<smem>>
    %21 = vector.broadcast %20 : i32 to vector<8x1xi32>
    %22 = arith.shrui %21, %10 : vector<8x1xi32>
    %c1_i32 = arith.constant 1 : i32
    %23 = vector.broadcast %c1_i32 : i32 to vector<8x1xi32>
    %24 = arith.andi %22, %23 : vector<8x1xi32>
    %c0_i32 = arith.constant 0 : i32
    %25 = vector.broadcast %c0_i32 : i32 to vector<8x1xi32>
    %26 = arith.cmpi sgt, %24, %25 : vector<8x1xi32>
    %cst_11 = arith.constant -1.000000e+30 : f32
    %27 = vector.broadcast %cst_11 : f32 to vector<8x1xf32>
    %28 = arith.select %26, %19, %27 : vector<8x1xi1>, vector<8x1xf32>
    %cst_12 = arith.constant dense<0xFF800000> : vector<1xf32>
    %29 = vector.multi_reduction <maximumf>, %28, %cst_12 [0] : vector<8x1xf32> to vector<1xf32>
    %30 = vector.shape_cast %29 : vector<1xf32> to vector<1x1xf32>
    %31 = vector.broadcast %30 : vector<1x1xf32> to vector<8x1xf32>
    %32 = arith.subf %28, %31 : vector<8x1xf32>
    %33 = math.exp %32 : vector<8x1xf32>
    %cst_13 = arith.constant dense<0.000000e+00> : vector<1xf32>
    %34 = vector.multi_reduction <add>, %33, %cst_13 [0] : vector<8x1xf32> to vector<1xf32>
    %35 = vector.shape_cast %34 : vector<1xf32> to vector<1x1xf32>
    %36 = vector.broadcast %33 : vector<8x1xf32> to vector<8x32xf32>
    %37 = arith.mulf %36, %12 : vector<8x32xf32>
    %cst_14 = arith.constant dense<0.000000e+00> : vector<32xf32>
    %38 = vector.multi_reduction <add>, %37, %cst_14 [0] : vector<8x32xf32> to vector<32xf32>
    %39 = vector.shape_cast %38 : vector<32xf32> to vector<1x32xf32>
    %40 = arith.mulf %39, %8 : vector<1x32xf32>
    %cst_15 = arith.constant dense<0.000000e+00> : vector<1xf32>
    %41 = vector.multi_reduction <add>, %40, %cst_15 [1] : vector<1x32xf32> to vector<1xf32>
    %42 = vector.shape_cast %41 : vector<1xf32> to vector<1x1xf32>
    %43 = tpu.reciprocal %35 {approx = true} : vector<1x1xf32> -> vector<1x1xf32>
    %44 = arith.mulf %42, %43 : vector<1x1xf32>
    %45 = vector.extract_strided_slice %4 {offsets = [0, 0], sizes = [1, 32], strides = [1, 1]} : vector<2x32xf32> to vector<1x32xf32>
    %46 = arith.mulf %45, %9 : vector<1x32xf32>
    %cst_16 = arith.constant dense<0.000000e+00> : vector<1xf32>
    %47 = vector.multi_reduction <add>, %46, %cst_16 [1] : vector<1x32xf32> to vector<1xf32>
    %48 = vector.shape_cast %47 : vector<1xf32> to vector<1x1xf32>
    %49 = arith.addf %44, %48 : vector<1x1xf32>
    %c0_17 = arith.constant 0 : index
    %c0_18 = arith.constant 0 : index
    %50 = vector.load %arg5[%c0_17, %c0_18] : memref<1x1xf32, #tpu.memory_space<vmem>>, vector<1x1xf32>
    %51 = arith.addf %49, %50 : vector<1x1xf32>
    %c0_19 = arith.constant 0 : index
    %c0_20 = arith.constant 0 : index
    %52 = vector.load %arg6[%c0_19, %c0_20] : memref<2x1xf32, #tpu.memory_space<vmem>>, vector<1x1xf32>
    tpu.vector_store %arg6[%c0_19, %c0_20], %51 {strides = array<i32>} : memref<2x1xf32, #tpu.memory_space<vmem>>, vector<1x1xf32>,
    %53 = vector.extract_strided_slice %3 {offsets = [8, 32], sizes = [8, 32], strides = [1, 1]} : vector<18x96xf32> to vector<8x32xf32>
    %54 = vector.extract_strided_slice %3 {offsets = [8, 64], sizes = [8, 32], strides = [1, 1]} : vector<18x96xf32> to vector<8x32xf32>
    %55 = vector.extract_strided_slice %5 {offsets = [1, 0], sizes = [1, 32], strides = [1, 1]} : vector<2x32xf32> to vector<1x32xf32>
    %56 = vector.broadcast %55 : vector<1x32xf32> to vector<8x32xf32>
    %57 = arith.mulf %56, %53 : vector<8x32xf32>
    %cst_21 = arith.constant dense<0.000000e+00> : vector<8xf32>
    %58 = vector.multi_reduction <add>, %57, %cst_21 [1] : vector<8x32xf32> to vector<8xf32>
    %59 = vector.shape_cast %58 : vector<8xf32> to vector<8x1xf32>
    %60 = vector.broadcast %7 : f32 to vector<8x1xf32>
    %61 = arith.mulf %59, %60 : vector<8x1xf32>
    %c1 = arith.constant 1 : index
    %62 = memref.load %arg0[%c1] : memref<2xi32, #tpu.memory_space<smem>>
    %63 = vector.broadcast %62 : i32 to vector<8x1xi32>
    %64 = arith.shrui %63, %10 : vector<8x1xi32>
    %c1_i32_22 = arith.constant 1 : i32
    %65 = vector.broadcast %c1_i32_22 : i32 to vector<8x1xi32>
    %66 = arith.andi %64, %65 : vector<8x1xi32>
    %c0_i32_23 = arith.constant 0 : i32
    %67 = vector.broadcast %c0_i32_23 : i32 to vector<8x1xi32>
    %68 = arith.cmpi sgt, %66, %67 : vector<8x1xi32>
    %cst_24 = arith.constant -1.000000e+30 : f32
    %69 = vector.broadcast %cst_24 : f32 to vector<8x1xf32>
    %70 = arith.select %68, %61, %69 : vector<8x1xi1>, vector<8x1xf32>
    %cst_25 = arith.constant dense<0xFF800000> : vector<1xf32>
    %71 = vector.multi_reduction <maximumf>, %70, %cst_25 [0] : vector<8x1xf32> to vector<1xf32>
    %72 = vector.shape_cast %71 : vector<1xf32> to vector<1x1xf32>
    %73 = vector.broadcast %72 : vector<1x1xf32> to vector<8x1xf32>
    %74 = arith.subf %70, %73 : vector<8x1xf32>
    %75 = math.exp %74 : vector<8x1xf32>
    %cst_26 = arith.constant dense<0.000000e+00> : vector<1xf32>
    %76 = vector.multi_reduction <add>, %75, %cst_26 [0] : vector<8x1xf32> to vector<1xf32>
    %77 = vector.shape_cast %76 : vector<1xf32> to vector<1x1xf32>
    %78 = vector.broadcast %75 : vector<8x1xf32> to vector<8x32xf32>
    %79 = arith.mulf %78, %54 : vector<8x32xf32>
    %cst_27 = arith.constant dense<0.000000e+00> : vector<32xf32>
    %80 = vector.multi_reduction <add>, %79, %cst_27 [0] : vector<8x32xf32> to vector<32xf32>
    %81 = vector.shape_cast %80 : vector<32xf32> to vector<1x32xf32>
    %82 = arith.mulf %81, %8 : vector<1x32xf32>
    %cst_28 = arith.constant dense<0.000000e+00> : vector<1xf32>
    %83 = vector.multi_reduction <add>, %82, %cst_28 [1] : vector<1x32xf32> to vector<1xf32>
    %84 = vector.shape_cast %83 : vector<1xf32> to vector<1x1xf32>
    %85 = tpu.reciprocal %77 {approx = true} : vector<1x1xf32> -> vector<1x1xf32>
    %86 = arith.mulf %84, %85 : vector<1x1xf32>
    %87 = vector.extract_strided_slice %4 {offsets = [1, 0], sizes = [1, 32], strides = [1, 1]} : vector<2x32xf32> to vector<1x32xf32>
    %88 = arith.mulf %87, %9 : vector<1x32xf32>
    %cst_29 = arith.constant dense<0.000000e+00> : vector<1xf32>
    %89 = vector.multi_reduction <add>, %88, %cst_29 [1] : vector<1x32xf32> to vector<1xf32>
    %90 = vector.shape_cast %89 : vector<1xf32> to vector<1x1xf32>
    %91 = arith.addf %86, %90 : vector<1x1xf32>
    %c0_30 = arith.constant 0 : index
    %c0_31 = arith.constant 0 : index
    %92 = vector.load %arg5[%c0_30, %c0_31] : memref<1x1xf32, #tpu.memory_space<vmem>>, vector<1x1xf32>
    %93 = arith.addf %91, %92 : vector<1x1xf32>
    %c1_32 = arith.constant 1 : index
    %c0_33 = arith.constant 0 : index
    %94 = vector.load %arg6[%c1_32, %c0_33] : memref<2x1xf32, #tpu.memory_space<vmem>>, vector<1x1xf32>
    tpu.vector_store %arg6[%c1_32, %c0_33], %93 {strides = array<i32>} : memref<2x1xf32, #tpu.memory_space<vmem>>, vector<1x1xf32>,
    return
  }
}

</mosaic_0001>

<llo_original>
// kernel: tpu_custom_call.1
$region0: #{tpu_custom_call.1}
  #allocation0 [shape = 'u32[]', space=smem, size = 0x4, offset = 0x4, fixed_abs, tag = 'smem constant byte address 0x4 - core index']
  #allocation1 [shape = 'u32[144,128]{1,0:T(1,128)}', space=vmem, size = 0x12000, scoped, tag = 'internal scratch']
  #allocation2 [shape = 'f32[1,1]{1,0:T(1,128)S(1)}', space=vmem, size = 0x200, scoped, tag = 'scoped memory for tpu_custom_call.1']
  %s0 = inlined_call_operand.vmem [shape: s32[2], index: 0, kind: input, shape index: {}]
  %s1 = inlined_call_operand.hbm [shape: f32[18,32], index: 1, kind: input, shape index: {}]
  %s2 = inlined_call_operand.hbm [shape: bf16[32,96], index: 2, kind: input, shape index: {}]
  %s3 = inlined_call_operand.vmem [shape: f32[1,32], index: 3, kind: input, shape index: {}]
  %s4 = inlined_call_operand.vmem [shape: f32[1,32], index: 4, kind: input, shape index: {}]
  %s5 = inlined_call_operand.<no memory space> [shape: f32[1,1], index: 5, kind: input, shape index: {}]
  %s6 = inlined_call_operand.vmem [shape: f32[2,1], index: 6, kind: output, shape index: {}]
  %s7 = sld [smem:[#allocation0]]
  $region46: #{tpu_custom_call.1} parent=0
    _
  %s9 = ssub.s32 1, %s7
  %s10 = scalar_select 0, %s9, %s7
  %v11 = vstv %s5
  %12 = vst [vmem:[#allocation2] sm:$0x1] %v11
  $region1: #{tpu_custom_call.1} parent=0
    #allocation3 [shape = 'u8[512]{0}', space=smem, size = 0x200, scoped, tag = 'input window, operand 0, single buffered']
    #allocation4 [shape = 's32[1]{0}', space=sflag, size = 0x4, scoped, tag = 'scoped memory for tpu_custom_call.1']
    #allocation5 [shape = 's32[1]{0}', space=sflag, size = 0x4, scoped, tag = 'scoped memory for tpu_custom_call.1']
    #allocation6 [shape = 'u8[12288]{0}', space=vmem, size = 0x3000, scoped, tag = 'input window, operand 1, single buffered']
    #allocation7 [shape = 'u8[8192]{0}', space=vmem, size = 0x2000, scoped, tag = 'input window, operand 2, single buffered']
    #allocation8 [shape = 's32[1]{0}', space=sflag, size = 0x4, scoped, tag = 'scoped memory for tpu_custom_call.1']
    %13 = vsyncpa [#allocation5], 0
    %14 = vsyncpa [#allocation4], 0
    %15 = vsyncpa [#allocation8], 0
    // Predicated region
    $region2: #{tpu_custom_call.1} parent=1 // pred_check
      _
    $region3: #{tpu_custom_call.1} parent=1 // pred_check_branch
      %17 = sbr.rel (0) target = $region5
    $region4: #{tpu_custom_call.1} parent=1 // pred_region
      %s19 = ssub.s32 16, 16
      %20 = vsyncadd [#allocation5], %s19
      %s22 = sshll.u32 %s0, 4
      %s23 = int_to_ptr.vmem [resolvable:$true] %s22
      %25 = dma.vmem_to_smem %s23, 16, [#allocation3], [#allocation5]
    $region5: #{tpu_custom_call.1} parent=1 // pred_fallthru
      _
    // Predicated region
    $region6: #{tpu_custom_call.1} parent=1 // pred_check
      _
    $region7: #{tpu_custom_call.1} parent=1 // pred_check_branch
      %27 = sbr.rel (0) target = $region9
    $region8: #{tpu_custom_call.1} parent=1 // pred_region
      %s29 = ssub.s32 384, 384
      %30 = vsyncadd [#allocation4], %s29
      %s31 = sshll.u32 [#allocation6], 4
      %s32 = int_to_ptr.vmem [resolvable:$true] %s31
      %37 = dma.hbm_to_vmem [thread:$0]  %s1, 384, %s32, [#allocation4], 128, 128, 8
    $region9: #{tpu_custom_call.1} parent=1 // pred_fallthru
      _
    // Predicated region
    $region10: #{tpu_custom_call.1} parent=1 // pred_check
      _
    $region11: #{tpu_custom_call.1} parent=1 // pred_check_branch
      %39 = sbr.rel (0) target = $region13
    $region12: #{tpu_custom_call.1} parent=1 // pred_region
      %s41 = ssub.s32 256, 256
      %42 = vsyncadd [#allocation8], %s41
      %s43 = sshll.u32 [#allocation7], 4
      %s44 = int_to_ptr.vmem [resolvable:$true] %s43
      %49 = dma.hbm_to_vmem [thread:$0]  %s2, 256, %s44, [#allocation8], 64, 64, 4
    $region13: #{tpu_custom_call.1} parent=1 // pred_fallthru
      _
    // Predicated region
    $region14: #{tpu_custom_call.1} parent=1 // pred_check
      _
    $region15: #{tpu_custom_call.1} parent=1 // pred_check_branch
      %51 = sbr.rel (0) target = $region17
    $region16: #{tpu_custom_call.1} parent=1 // pred_region
      _
    $region17: #{tpu_custom_call.1} parent=1 // pred_fallthru
      _
    // Predicated region
    $region18: #{tpu_custom_call.1} parent=1 // pred_check
      _
    $region19: #{tpu_custom_call.1} parent=1 // pred_check_branch
      %53 = sbr.rel (0) target = $region21
    $region20: #{tpu_custom_call.1} parent=1 // pred_region
      _
    $region21: #{tpu_custom_call.1} parent=1 // pred_fallthru
      _
    // Predicated region
    $region22: #{tpu_custom_call.1} parent=1 // pred_check
      _
    $region23: #{tpu_custom_call.1} parent=1 // pred_check_branch
      %55 = sbr.rel (0) target = $region25
    $region24: #{tpu_custom_call.1} parent=1 // pred_region
      _
    $region25: #{tpu_custom_call.1} parent=1 // pred_fallthru
      _
    // Predicated region
    $region26: #{tpu_custom_call.1} parent=1 // pred_check
      _
    $region27: #{tpu_custom_call.1} parent=1 // pred_check_branch
      %57 = sbr.rel (0) target = $region29
    $region28: #{tpu_custom_call.1} parent=1 // pred_region
      %58 = dma.done [#allocation5], 16
    $region29: #{tpu_custom_call.1} parent=1 // pred_fallthru
      _
    // Predicated region
    $region30: #{tpu_custom_call.1} parent=1 // pred_check
      _
    $region31: #{tpu_custom_call.1} parent=1 // pred_check_branch
      %60 = sbr.rel (0) target = $region33
    $region32: #{tpu_custom_call.1} parent=1 // pred_region
      %61 = dma.done [#allocation4], 384
    $region33: #{tpu_custom_call.1} parent=1 // pred_fallthru
      _
    // Predicated region
    $region34: #{tpu_custom_call.1} parent=1 // pred_check
      _
    $region35: #{tpu_custom_call.1} parent=1 // pred_check_branch
      %63 = sbr.rel (0) target = $region37
    $region36: #{tpu_custom_call.1} parent=1 // pred_region
      %64 = dma.done [#allocation8], 256
    $region37: #{tpu_custom_call.1} parent=1 // pred_fallthru
      _
    %65 = sfence
    %v67 = vld [vmem:[#allocation6] sm:$0xff]
    %v68 = vld [vmem:[#allocation6 + $0x8] sm:$0xff]
    %v69 = vld [vmem:[#allocation6 + $0x10] sm:$0x3]
    %v70 = vpack.c.bf16 %v68, %v67
    %v71 = vpack.c.bf16 %v69, %v69
    %v72 = vld [vmem:[#allocation7] sm:$0xf]
    %v73 = vld [vmem:[#allocation7 + $0x4] sm:$0xf]
    %v74 = vld [vmem:[#allocation7 + $0x8] sm:$0xf]
    %v75 = vld [vmem:[#allocation7 + $0xc] sm:$0xf]
    %v80 = vunpack.c.l.b16 %v72
    %v81 = vunpack.c.l.b16 %v73
    %v82 = vunpack.c.l.b16 %v74
    %v83 = vunpack.c.l.b16 %v75
    %v84 = vpack.c.b16 %v81, %v80
    %v85 = vpack.c.b16 %v83, %v82
    %vm88 = vcmask 261120
    %v90 = vsel %vm88, %v70, 0
    %v93 = vsel %vm88, %v71, 0
    %95 = vmatprep.subr.bf16.mxu0 0
    %96 = vmatpush1.bf16.msra.mxu0 0
    %97 = vmatprep.subr.bf16.mxu0 0
    %98 = vmatpush1.bf16.msra.mxu0 0
    %99 = vmatprep.subr.bf16.mxu0 0
    %100 = vmatpush1.bf16.msra.mxu0 0
    %101 = vmatprep.subr.bf16.mxu0 0
    %102 = vmatpush1.bf16.msra.mxu0 0
    %103 = vmatprep.subr.bf16.mxu0 0
    %104 = vmatpush1.bf16.msra.mxu0 0
    %105 = vmatprep.subr.bf16.mxu0 0
    %106 = vmatpush1.bf16.msra.mxu0 0
    %107 = vmatprep.subr.bf16.mxu0 0
    %108 = vmatpush1.bf16.msra.mxu0 %v85
    %109 = vmatprep.subr.bf16.mxu0 0
    %110 = vmatpush1.bf16.msra.mxu0 %v84
    %111 = vmatprep.subr.bf16.mxu0 0
    %112 = vmatpush2.bf16.msra.mxu0 0
    %113 = vmatprep.subr.bf16.mxu0 0
    %114 = vmatpush2.bf16.msra.mxu0 0
    %115 = vmatprep.subr.bf16.mxu0 0
    %116 = vmatpush2.bf16.msra.mxu0 0
    %117 = vmatprep.subr.bf16.mxu0 0
    %118 = vmatpush2.bf16.msra.mxu0 0
    %119 = vmatprep.subr.bf16.mxu0 0
    %120 = vmatpush2.bf16.msra.mxu0 0
    %121 = vmatprep.subr.bf16.mxu0 0
    %122 = vmatpush2.bf16.msra.mxu0 0
    %123 = vmatprep.subr.bf16.mxu0 0
    %124 = vmatpush2.bf16.msra.mxu0 0
    %125 = vmatprep.subr.bf16.mxu0 0
    %126 = vmatpush2.bf16.msra.mxu0 0
    %127 = vmatprep.mubr.bf16.mxu0 0
    %128 = vmatmul.mubr.bf16.gmra.mxu0 %v90
    %v129 = vpop.f32.mrf.mxu0
    %v130 = vadd.f32 0.0, %v129
    %v131 = vpop.f32.mrf.mxu0
    %v132 = vpop.f32.mrf.mxu0
    %v133 = vadd.f32 0.0, %v132
    %v134 = vpop.f32.mrf.mxu0
    %135 = vmatprep.mubr.bf16.mxu0 0
    %136 = vmatmul.mubr.bf16.gmra.mxu0 %v93
    %v137 = vpop.f32.mrf.mxu0
    %v138 = vadd.f32 0.0, %v137
    %v139 = vpop.f32.mrf.mxu0
    %v140 = vpop.f32.mrf.mxu0
    %v141 = vpop.f32.mrf.mxu0
    %142 = vdwg.mxu0
    %v143 = vld [vmem:[%s3] sm:$0x1]
    %v144 = vld [vmem:[%s4] sm:$0x1]
    %v145 = vlaneseq
    %v146 = vshrl.u32 %v145, 7
    %v147 = vlaneseq
    %v148 = vshrl.u32 %v147, 7
    %v149 = vsub.s32 0, %v148
    %v150 = vrot.slane %v138, %v149
    %152 = vrot.lane.b32.xlu0 %v130, 96
    %v153 = vpop.permute.xlu0 %152
    %v155 = vmul.f32 %v150, %v153
    %v156 = vsel %vm88, %v155, 0.0
    %157 = vadd.xlane.f32.xlu0 %v156
    %v158 = vpop.xlane.xlu0 %157
    %v159 = vmul.f32 %v158, 0.17677669
    %s160 = sld [smem:[#allocation3]]
    %v161 = vstv %s160
    %v162 = vshrl.u32 %v161, %v146
    %v163 = vand.u32 %v162, 1
    %vm164 = vcmp.gt.s32.totalorder %v163, 0
    %v165 = vsel %vm164, %v159, -1e+30
    %v166 = vrot.slane %v165, 4
    %v167 = vmax.f32 %v165, %v166
    %v168 = vrot.slane %v167, 2
    %v169 = vmax.f32 %v167, %v168
    %v170 = vrot.slane %v169, 1
    %v171 = vmax.f32 %v169, %v170
    %v172 = vsub.f32 %v165, %v171
    %v173 = vmul.f32 %v172, 1.442695
    %v174 = vpow.pop %v173
    %v175 = vrot.slane %v174, 4
    %v176 = vadd.f32 %v174, %v175
    %v177 = vrot.slane %v176, 2
    %v178 = vadd.f32 %v176, %v177
    %v179 = vrot.slane %v178, 1
    %v180 = vadd.f32 %v178, %v179
    %v181 = vmul.f32 %v174, %v130
    %vm182 = vcmask 785920
    %v183 = vsel %vm182, %v181, 0.0
    %v184 = vrot.slane %v183, 4
    %v185 = vadd.f32 %v183, %v184
    %v186 = vrot.slane %v185, 2
    %v187 = vadd.f32 %v185, %v186
    %v188 = vrot.slane %v187, 1
    %v189 = vadd.f32 %v187, %v188
    %v191 = vlaneseq
    %v192 = vshrl.u32 %v191, 7
    %v193 = vsub.s32 0, %v192
    %v194 = vrot.slane %v143, %v193
    %195 = vrot.lane.b32.xlu0 %v194, 64
    %v196 = vpop.permute.xlu0 %195
    %v198 = vmul.f32 %v189, %v196
    %200 = vrot.lane.b32.xlu0 %v198, 64
    %v201 = vpop.permute.xlu0 %200
    %vm203 = vcmask 253952
    %v204 = vsel %vm203, %v201, 0.0
    %205 = vadd.xlane.f32.xlu0 %v204
    %v206 = vpop.xlane.xlu0 %205
    %v207 = vrcp.pop %v180
    %v208 = vmul.f32 %v206, %v207
    %v209 = vmul.f32 %v69, %v144
    %v210 = vsel %vm203, %v209, 0.0
    %211 = vadd.xlane.f32.xlu0 %v210
    %v212 = vpop.xlane.xlu0 %211
    %v213 = vadd.f32 %v208, %v212
    %v214 = vld [vmem:[#allocation2] sm:$0x1]
    %v215 = vadd.f32 %v213, %v214
    %vm216 = vcmask 0
    %217 = vst.msk [vmem:[%s6] sm:$0x1] %vm216, %v215
    %v218 = vlaneseq
    %v219 = vshrl.u32 %v218, 7
    %v220 = vsub.s32 1, %v219
    %v221 = vrot.slane %v138, %v220
    %223 = vrot.lane.b32.xlu0 %v133, 96
    %v224 = vpop.permute.xlu0 %223
    %v226 = vmul.f32 %v221, %v224
    %v227 = vsel %vm88, %v226, 0.0
    %228 = vadd.xlane.f32.xlu0 %v227
    %v229 = vpop.xlane.xlu0 %228
    %v230 = vmul.f32 %v229, 0.17677669
    %s231 = sld [smem:[#allocation3 + $0x1]]
    %v232 = vstv %s231
    %v233 = vshrl.u32 %v232, %v146
    %v234 = vand.u32 %v233, 1
    %vm235 = vcmp.gt.s32.totalorder %v234, 0
    %v236 = vsel %vm235, %v230, -1e+30
    %v237 = vrot.slane %v236, 4
    %v238 = vmax.f32 %v236, %v237
    %v239 = vrot.slane %v238, 2
    %v240 = vmax.f32 %v238, %v239
    %v241 = vrot.slane %v240, 1
    %v242 = vmax.f32 %v240, %v241
    %v243 = vsub.f32 %v236, %v242
    %v244 = vmul.f32 %v243, 1.442695
    %v245 = vpow.pop %v244
    %v246 = vrot.slane %v245, 4
    %v247 = vadd.f32 %v245, %v246
    %v248 = vrot.slane %v247, 2
    %v249 = vadd.f32 %v247, %v248
    %v250 = vrot.slane %v249, 1
    %v251 = vadd.f32 %v249, %v250
    %v252 = vmul.f32 %v245, %v133
    %v253 = vsel %vm182, %v252, 0.0
    %v254 = vrot.slane %v253, 4
    %v255 = vadd.f32 %v253, %v254
    %v256 = vrot.slane %v255, 2
    %v257 = vadd.f32 %v255, %v256
    %v258 = vrot.slane %v257, 1
    %v259 = vadd.f32 %v257, %v258
    %v260 = vmul.f32 %v259, %v196
    %262 = vrot.lane.b32.xlu0 %v260, 64
    %v263 = vpop.permute.xlu0 %262
    %v265 = vsel %vm203, %v263, 0.0
    %266 = vadd.xlane.f32.xlu0 %v265
    %v267 = vpop.xlane.xlu0 %266
    %v268 = vrcp.pop %v251
    %v269 = vmul.f32 %v267, %v268
    %v271 = vlaneseq
    %v272 = vshrl.u32 %v271, 7
    %v273 = vsub.s32 0, %v272
    %v274 = vrot.slane %v144, %v273
    %v276 = vmul.f32 %v69, %v274
    %vm277 = vcmask 254977
    %v278 = vsel %vm277, %v276, 0.0
    %279 = vadd.xlane.f32.xlu0 %v278
    %v280 = vpop.xlane.xlu0 %279
    %v282 = vrot.slane %v280, 1
    %v284 = vadd.f32 %v269, %v282
    %v285 = vld [vmem:[#allocation2] sm:$0x1]
    %v286 = vadd.f32 %v284, %v285
    %287 = vst.msk [vmem:[%s6 + $0x1] sm:$0x1] %vm216, %v286
    // Predicated region
    $region38: #{tpu_custom_call.1} parent=1 // pred_check
      _
    $region39: #{tpu_custom_call.1} parent=1 // pred_check_branch
      %289 = sbr.rel (0) target = $region41
    $region40: #{tpu_custom_call.1} parent=1 // pred_region
      _
    $region41: #{tpu_custom_call.1} parent=1 // pred_fallthru
      _
    // Predicated region
    $region42: #{tpu_custom_call.1} parent=1 // pred_check
      _
    $region43: #{tpu_custom_call.1} parent=1 // pred_check_branch
      %291 = sbr.rel (0) target = $region45
    $region44: #{tpu_custom_call.1} parent=1 // pred_region
      _
    $region45: #{tpu_custom_call.1} parent=1 // pred_fallthru
      _
    %292 = vsyncpa [#allocation4], 1
    %293 = vsyncpa [#allocation8], 1
    %294 = vsyncpa [#allocation5], 1

</llo_original>
